<compile_context>
chip_gen: v7x
topology: tpu7x:2x2x1
jax: 0.10.0
libtpu: 0.0.40
codegen_flags: <defaults>
</compile_context>

<pallas_src>
import jax
import jax.numpy as jnp
from jax.experimental import pallas as pl
from jax.experimental.pallas import tpu as pltpu


def _round_up(x, m):
    return ((x + m - 1) // m) * m


def _sublane_multiple(dtype):
    # Rows per sublane tile: 8 for f32, 16 for bf16, 32 for int8/fp8.
    return max(8, 32 // max(jnp.dtype(dtype).itemsize, 1))


def _default_use_mxu():
    # v7x: 3.2 TB/s HBM split across 2 TCs makes the 4x VPU broadcast-FMA
    # path co-critical with the output writeback -> use the idle MXU there.
    # v5e/v6e: HBM-writeback bound with >1.5x VALU slack -> keep the VPU path.
    try:
        kind = jax.devices()[0].device_kind.lower()
    except Exception:
        return False
    return "v7" in kind


def _make_root_emb_kernel(use_mxu):
    def kernel(x_ref, w_ref, b_ref, o_ref):
        """One row-tile of  y = x @ W^T + b.

        x_ref: (TM, F)  F = 4 root features (lane-padded in VMEM, tiny)
        w_ref: (F, E)   weight (pre-transposed), resident across the grid
        b_ref: (1, E)   bias, resident
        o_ref: (TM, E)  output tile (E = 512 default -> lane-dense stores)
        """
        x = x_ref[...].astype(jnp.float32)                 # (TM, F)
        w = w_ref[...]                                     # (F, E) f32
        b = b_ref[...]                                     # (1, E) f32
        if use_mxu:
            # f32 accumulate + HIGHEST precision so the MXU path matches the
            # exact-f32 reference (K=4, so fill/drain dominates but the vex
            # slot is otherwise idle on v7x).
            acc = jax.lax.dot_general(
                x, w, (((1,), (0,)), ((), ())),
                preferred_element_type=jnp.float32,
                precision=jax.lax.Precision.HIGHEST) + b
        else:
            # Rank-4 update as 4 VPU broadcast multiply-adds (MXU would be
            # pure fill/drain at K=4 on v5e/v6e).
            acc = jnp.broadcast_to(b, o_ref.shape)
            for k in range(x.shape[1]):                    # static unroll, F = 4
                acc = acc + x[:, k:k + 1] * w[k:k + 1, :]
        o_ref[...] = acc.astype(o_ref.dtype)

    return kernel


def _root_encoder_pallas(root_motion, weight, bias, *, tile_m, out_dtype, use_mxu):
    B, T, F = root_motion.shape
    E = weight.shape[0]
    M = B * T

    x2d = root_motion.reshape(M, F)                        # contiguous -> free reshape
    w_t = weight.T.astype(jnp.float32)                     # (F, E)
    b2d = bias.reshape(1, E).astype(jnp.float32)           # (1, E)

    # Sublane tiling of tile_m must respect BOTH the input and output dtypes.
    sub = max(_sublane_multiple(x2d.dtype), _sublane_multiple(out_dtype))

    # Per-row VMEM footprint of one tile.  The (tile_m, 4) x tile lane-pads to
    # 128 lanes in VMEM (32x the real data) -- account for it so a big tile_m
    # never silently blows the VMEM budget.
    x_row_bytes = 128 * x2d.dtype.itemsize
    o_row_bytes = _round_up(E, 128) * jnp.dtype(out_dtype).itemsize
    vmem_budget = 24 * 1024 * 1024                         # double-buffered tiles
    tile_cap = max(sub,
                   (vmem_budget // (2 * (x_row_bytes + o_row_bytes))) // sub * sub)

    if tile_m is None:
        tile_m = min(4096, tile_cap)
        # At least 4 grid steps (2 per v7x TensorCore) so input prefetch and
        # output writeback stay double-buffered even at mid-size M.
        tile_m = min(tile_m, max(sub, _round_up(pl.cdiv(M, 4), sub)))
    tile_m = max(sub, _round_up(tile_m, sub))

    steps = pl.cdiv(M, tile_m)
    if steps > 1 and steps % 2 == 1:
        # Keep the grid length even so v7x's two TensorCores get equal work.
        tile_m = max(sub, _round_up(pl.cdiv(M, steps + 1), sub))
        steps = pl.cdiv(M, tile_m)

    cost = pl.CostEstimate(
        flops=2 * M * F * E,
        transcendentals=0,
        bytes_accessed=(M * F * x2d.dtype.itemsize
                        + F * E * 4 + E * 4
                        + M * E * jnp.dtype(out_dtype).itemsize),
    )

    out = pl.pallas_call(
        _make_root_emb_kernel(use_mxu),
        out_shape=jax.ShapeDtypeStruct((M, E), out_dtype),   # no padded rows/cols
        grid_spec=pl.GridSpec(
            grid=(steps,),
            in_specs=[
                pl.BlockSpec((tile_m, F), lambda i: (i, 0)),   # x row-tile (pipelined)
                pl.BlockSpec((F, E), lambda i: (0, 0)),        # weight (resident)
                pl.BlockSpec((1, E), lambda i: (0, 0)),        # bias   (resident)
            ],
            out_specs=pl.BlockSpec((tile_m, E), lambda i: (i, 0)),
        ),
        compiler_params=pltpu.CompilerParams(
            dimension_semantics=("parallel",),     # megacore / v7x dual-TC sharding
            vmem_limit_bytes=40 * 1024 * 1024,     # < v7x 64 MiB physical, > v5e default
        ),
        cost_estimate=cost,
    )(x2d, w_t, b2d)

    return out.reshape(B, T, E)


def root_encoder_forward(root_motion, weight, bias, *, tile_m=None, out_dtype=None,
                         use_mxu=None, min_pallas_rows=1024):
    """root_encoder.forward: nn.Linear(4, embed_dim) applied on the last axis.

    root_motion: (B, T, 4) ; weight: (embed_dim, 4) (PyTorch layout) ;
    bias: (embed_dim,) -> returns (B, T, embed_dim).

    Pass out_dtype=jnp.bfloat16 when the downstream transformer runs in bf16:
    output stores are >98% of HBM bytes, so this is ~2x on every generation.
    """
    B, T, F = root_motion.shape
    E = weight.shape[0]
    M = B * T
    if out_dtype is None:
        out_dtype = root_motion.dtype
    if use_mxu is None:
        use_mxu = _default_use_mxu()

    # Tiny problems: pallas_call launch overhead dwarfs the GEMM; let XLA fuse
    # a plain matmul into the surrounding graph instead.
    if M < min_pallas_rows:
        y = (jnp.dot(root_motion.astype(jnp.float32), weight.T.astype(jnp.float32))
             + bias.astype(jnp.float32))
        return y.astype(out_dtype)

    return _root_encoder_pallas(root_motion, weight, bias,
                                tile_m=tile_m, out_dtype=out_dtype, use_mxu=use_mxu)


def _init_params(key, embed_dim, in_features=4):
    # Mimics nn.Linear default init: U(-k, k), k = 1/sqrt(fan_in)
    kw, kb = jax.random.split(key)
    k = 1.0 / jnp.sqrt(jnp.float32(in_features))
    weight = jax.random.uniform(kw, (embed_dim, in_features), jnp.float32, -k, k)
    bias = jax.random.uniform(kb, (embed_dim,), jnp.float32, -k, k)
    return weight, bias


def _reference(x, weight, bias):
    # exact-f32 reference (avoid TPU default matmul precision in the check)
    return jnp.einsum("btf,ef->bte", x, weight,
                      precision=jax.lax.Precision.HIGHEST) + bias


if __name__ == "__main__":
    key = jax.random.PRNGKey(0)
    k_x1, k_x2, k_p = jax.random.split(key, 3)

    E = 512                      # module default embed_dim
    weight, bias = _init_params(k_p, embed_dim=E)

    # (1) small shape (B=2, T=8): force the Pallas path so the kernel itself
    #     (2-step grid, tiny tiles) is exercised at a small size.
    B, T = 2, 8
    x_small = jax.random.normal(k_x1, (B, T, 4), jnp.float32)
    y_small = jax.block_until_ready(
        root_encoder_forward(x_small, weight, bias, min_pallas_rows=0))
    assert y_small.shape == (B, T, E)
    assert jnp.allclose(y_small, _reference(x_small, weight, bias),
                        atol=1e-5, rtol=1e-5)

    # (2) larger, NON-tile-aligned shape (M = 3800 rows): exercises the ragged
    #     last output block (no explicit padding / trailing slice copy) with a
    #     4-step pipelined grid.
    B2, T2 = 2, 1900
    x_big = jax.random.normal(k_x2, (B2, T2, 4), jnp.float32)
    ref_big = _reference(x_big, weight, bias)
    y_big = jax.block_until_ready(root_encoder_forward(x_big, weight, bias))
    assert y_big.shape == (B2, T2, E)
    assert jnp.allclose(y_big, ref_big, atol=1e-4, rtol=1e-5)

    # (3) bf16 output path (halves the dominant HBM store traffic).
    y_bf16 = jax.block_until_ready(
        root_encoder_forward(x_big, weight, bias, out_dtype=jnp.bfloat16))
    assert y_bf16.dtype == jnp.bfloat16 and y_bf16.shape == (B2, T2, E)
    assert jnp.allclose(y_bf16.astype(jnp.float32), ref_big, atol=5e-2, rtol=5e-2)

    print("KERNEL_OK")
</pallas_src>

<mosaic_0001>
module attributes {stable_mosaic.version = 11 : i64} {
  func.func @kernel(%arg0: i32, %arg1: memref<8x4xf32, #tpu.memory_space<vmem>>, %arg2: memref<4x512xf32, #tpu.memory_space<vmem>>, %arg3: memref<1x512xf32, #tpu.memory_space<vmem>>, %arg4: memref<8x512xf32, #tpu.memory_space<vmem>>) attributes {dimension_semantics = [#tpu.dimension_semantics<parallel>], iteration_bounds = array<i64: 2>, scalar_prefetch = 0 : i64, scratch_operands = 0 : i64, tpu.core_type = #tpu.core_type<tc>, window_params = [{transform_indices = @transform_0, window_bounds = array<i64: 8, 4>}, {pipeline_mode = #tpu.pipeline_mode<synchronous>, transform_indices = @transform_1, window_bounds = array<i64: 4, 512>}, {pipeline_mode = #tpu.pipeline_mode<synchronous>, transform_indices = @transform_2, window_bounds = array<i64: 1, 512>}, {transform_indices = @transform_3, window_bounds = array<i64: 8, 512>}]} {
    %c0 = arith.constant 0 : index
    %c0_0 = arith.constant 0 : index
    %0 = vector.load %arg1[%c0, %c0_0] : memref<8x4xf32, #tpu.memory_space<vmem>>, vector<8x4xf32>
    %c0_1 = arith.constant 0 : index
    %c0_2 = arith.constant 0 : index
    %1 = vector.load %arg2[%c0_1, %c0_2] : memref<4x512xf32, #tpu.memory_space<vmem>>, vector<4x512xf32>
    %c0_3 = arith.constant 0 : index
    %c0_4 = arith.constant 0 : index
    %2 = vector.load %arg3[%c0_3, %c0_4] : memref<1x512xf32, #tpu.memory_space<vmem>>, vector<1x512xf32>
    %3 = vector.shape_cast %2 : vector<1x512xf32> to vector<1x512xf32>
    %4 = vector.broadcast %3 : vector<1x512xf32> to vector<8x512xf32>
    %5 = vector.extract_strided_slice %0 {offsets = [0, 0], sizes = [8, 1], strides = [1, 1]} : vector<8x4xf32> to vector<8x1xf32>
    %6 = vector.extract_strided_slice %1 {offsets = [0, 0], sizes = [1, 512], strides = [1, 1]} : vector<4x512xf32> to vector<1x512xf32>
    %7 = vector.broadcast %5 : vector<8x1xf32> to vector<8x512xf32>
    %8 = vector.broadcast %6 : vector<1x512xf32> to vector<8x512xf32>
    %9 = arith.mulf %7, %8 : vector<8x512xf32>
    %10 = arith.addf %4, %9 : vector<8x512xf32>
    %11 = vector.extract_strided_slice %0 {offsets = [0, 1], sizes = [8, 1], strides = [1, 1]} : vector<8x4xf32> to vector<8x1xf32>
    %12 = vector.extract_strided_slice %1 {offsets = [1, 0], sizes = [1, 512], strides = [1, 1]} : vector<4x512xf32> to vector<1x512xf32>
    %13 = vector.broadcast %11 : vector<8x1xf32> to vector<8x512xf32>
    %14 = vector.broadcast %12 : vector<1x512xf32> to vector<8x512xf32>
    %15 = arith.mulf %13, %14 : vector<8x512xf32>
    %16 = arith.addf %10, %15 : vector<8x512xf32>
    %17 = vector.extract_strided_slice %0 {offsets = [0, 2], sizes = [8, 1], strides = [1, 1]} : vector<8x4xf32> to vector<8x1xf32>
    %18 = vector.extract_strided_slice %1 {offsets = [2, 0], sizes = [1, 512], strides = [1, 1]} : vector<4x512xf32> to vector<1x512xf32>
    %19 = vector.broadcast %17 : vector<8x1xf32> to vector<8x512xf32>
    %20 = vector.broadcast %18 : vector<1x512xf32> to vector<8x512xf32>
    %21 = arith.mulf %19, %20 : vector<8x512xf32>
    %22 = arith.addf %16, %21 : vector<8x512xf32>
    %23 = vector.extract_strided_slice %0 {offsets = [0, 3], sizes = [8, 1], strides = [1, 1]} : vector<8x4xf32> to vector<8x1xf32>
    %24 = vector.extract_strided_slice %1 {offsets = [3, 0], sizes = [1, 512], strides = [1, 1]} : vector<4x512xf32> to vector<1x512xf32>
    %25 = vector.broadcast %23 : vector<8x1xf32> to vector<8x512xf32>
    %26 = vector.broadcast %24 : vector<1x512xf32> to vector<8x512xf32>
    %27 = arith.mulf %25, %26 : vector<8x512xf32>
    %28 = arith.addf %22, %27 : vector<8x512xf32>
    %c0_5 = arith.constant 0 : index
    %c0_6 = arith.constant 0 : index
    %29 = vector.load %arg4[%c0_5, %c0_6] : memref<8x512xf32, #tpu.memory_space<vmem>>, vector<8x512xf32>
    tpu.vector_store %arg4[%c0_5, %c0_6], %28 {strides = array<i32>} : memref<8x512xf32, #tpu.memory_space<vmem>>, vector<8x512xf32>,
    return
  }
  func.func @transform_0(%arg0: i32) -> (i32, i32) {
    %c0_i32 = arith.constant 0 : i32
    %c0_i32_0 = arith.constant 0 : i32
    return %arg0, %c0_i32 : i32, i32
  }
  func.func @transform_1(%arg0: i32) -> (i32, i32) {
    %c0_i32 = arith.constant 0 : i32
    %c0_i32_0 = arith.constant 0 : i32
    %c0_i32_1 = arith.constant 0 : i32
    return %c0_i32, %c0_i32_0 : i32, i32
  }
  func.func @transform_2(%arg0: i32) -> (i32, i32) {
    %c0_i32 = arith.constant 0 : i32
    %c0_i32_0 = arith.constant 0 : i32
    %c0_i32_1 = arith.constant 0 : i32
    return %c0_i32, %c0_i32_0 : i32, i32
  }
  func.func @transform_3(%arg0: i32) -> (i32, i32) {
    %c0_i32 = arith.constant 0 : i32
    %c0_i32_0 = arith.constant 0 : i32
    return %arg0, %c0_i32 : i32, i32
  }
}

</mosaic_0001>

<llo_original>
// kernel: tpu_custom_call.1
$region0: #{tpu_custom_call.1}
  #allocation0 [shape = 'u32[]', space=smem, size = 0x4, offset = 0x4, fixed_abs, tag = 'smem constant byte address 0x4 - core index']
  #allocation1 [shape = 'u32[144,128]{1,0:T(1,128)}', space=vmem, size = 0x12000, scoped, tag = 'internal scratch']
  %s0 = inlined_call_operand.vmem [shape: f32[16,4], index: 0, kind: input, shape index: {}]
  %s1 = inlined_call_operand.vmem [shape: f32[4,512], index: 1, kind: input, shape index: {}]
  %s2 = inlined_call_operand.vmem [shape: f32[1,512], index: 2, kind: input, shape index: {}]
  %s3 = inlined_call_operand.hbm [shape: f32[16,512], index: 3, kind: output, shape index: {}]
  %s4 = sld [smem:[#allocation0]]
  $region45: #{tpu_custom_call.1} parent=0
    _
  %s6 = ssub.s32 1, %s4
  %s7 = scalar_select 0, %s6, %s4
  $region1: #{tpu_custom_call.1} parent=0
    #allocation2 [shape = 'u8[32768]{0}', space=vmem, size = 0x8000, scoped, tag = 'output window, operand 0']
    #allocation3 [shape = 's32[2]{0}', space=sflag, size = 0x8, scoped, tag = 'scoped memory for tpu_custom_call.1']
    %8 = vsyncpa [#allocation3], 0
    %s9 = scalar_lea.sflag [#allocation3], 1
    %10 = vsyncpa %s9, 0
    loop: start=0, step=1, limit=4
    $region2: #{tpu_custom_call.1} parent=1 // loop_pre_header
      _
    $region3: #{tpu_custom_call.1} parent=1 // loop_header
      %s12 = sphi 0, %s16
      %p13 = scmp.ge.s32.totalorder %s12, 4
      %s22 = sphi 0, %s24
      %s25 = sphi 0, %s22
      %s26 = sphi 0, %s25
      %s42 = sphi 0, %s26
      %s46 = sphi 0, %s46
      %s48 = sphi 0, %s46
      %s49 = sphi 0, %s48
      %s63 = sphi 0, %s49
      %s67 = sphi 0, %s67
      %s69 = sphi 0, %s67
      %s70 = sphi 0, %s69
      %s84 = sphi 0, %s70
      %s90 = sphi 0, %s92
      %s93 = sphi 0, %s90
      %s94 = sphi 0, %s93
      %s110 = sphi 0, %s94
    $region4: #{tpu_custom_call.1} parent=1 // loop_header_branch
      %15 = sbr.rel (%p13) target = $region8
    $region5: #{tpu_custom_call.1} parent=1 // loop_body
      %s17 = ssub.s32 %s12, 1
      %s18 = ssub.s32 %s12, 2
      %s19 = sadd.s32 %s12, 1
      %s20 = ssub.s32 %s12, %s19
      %p21 = scmp.eq.s32.totalorder %s20, 0
      %s23 = sadd.s32 %s22, 1
      %s24 = scalar_select %p21, %s22, %s23
      %p27 = pneg %p21
      %p28 = scmp.eq.s32.totalorder %s12, 1
      %p29 = por %p27, %p28
      %p30 = scmp.ne.s32.totalorder %s22, %s25
      %p31 = scmp.eq.s32.totalorder %s12, 0
      %p32 = por %p30, %p31
      %p33 = scmp.ne.s32.totalorder %s22, %s25
      %p34 = scmp.eq.s32.totalorder %s17, 1
      %p35 = por %p33, %p34
      %p36 = scmp.ne.s32.totalorder %s25, %s26
      %p37 = scmp.eq.s32.totalorder %s17, 0
      %p38 = por %p36, %p37
      %p39 = scmp.ne.s32.totalorder %s25, %s26
      %p40 = scmp.eq.s32.totalorder %s18, 1
      %p41 = por %p39, %p40
      %p43 = scmp.ne.s32.totalorder %s26, %s42
      %p44 = scmp.eq.s32.totalorder %s18, 0
      %p45 = por %p43, %p44
      %s47 = sadd.s32 %s46, 1
      %p50 = scmp.eq.s32.totalorder %s12, 1
      %p51 = scmp.ne.s32.totalorder %s46, %s48
      %p52 = scmp.eq.s32.totalorder %s12, 0
      %p53 = por %p51, %p52
      %p54 = scmp.ne.s32.totalorder %s46, %s48
      %p55 = scmp.eq.s32.totalorder %s17, 1
      %p56 = por %p54, %p55
      %p57 = scmp.ne.s32.totalorder %s48, %s49
      %p58 = scmp.eq.s32.totalorder %s17, 0
      %p59 = por %p57, %p58
      %p60 = scmp.ne.s32.totalorder %s48, %s49
      %p61 = scmp.eq.s32.totalorder %s18, 1
      %p62 = por %p60, %p61
      %p64 = scmp.ne.s32.totalorder %s49, %s63
      %p65 = scmp.eq.s32.totalorder %s18, 0
      %p66 = por %p64, %p65
      %s68 = sadd.s32 %s67, 1
      %p71 = scmp.eq.s32.totalorder %s12, 1
      %p72 = scmp.ne.s32.totalorder %s67, %s69
      %p73 = scmp.eq.s32.totalorder %s12, 0
      %p74 = por %p72, %p73
      %p75 = scmp.ne.s32.totalorder %s67, %s69
      %p76 = scmp.eq.s32.totalorder %s17, 1
      %p77 = por %p75, %p76
      %p78 = scmp.ne.s32.totalorder %s69, %s70
      %p79 = scmp.eq.s32.totalorder %s17, 0
      %p80 = por %p78, %p79
      %p81 = scmp.ne.s32.totalorder %s69, %s70
      %p82 = scmp.eq.s32.totalorder %s18, 1
      %p83 = por %p81, %p82
      %p85 = scmp.ne.s32.totalorder %s70, %s84
      %p86 = scmp.eq.s32.totalorder %s18, 0
      %p87 = por %p85, %p86
      %s88 = ssub.s32 %s12, %s19
      %p89 = scmp.eq.s32.totalorder %s88, 0
      %s91 = sadd.s32 %s90, 1
      %s92 = scalar_select %p89, %s90, %s91
      %p95 = pneg %p89
      %p96 = scmp.eq.s32.totalorder %s12, 1
      %p97 = por %p95, %p96
      %p98 = scmp.ne.s32.totalorder %s90, %s93
      %p99 = scmp.eq.s32.totalorder %s12, 0
      %p100 = por %p98, %p99
      %p101 = scmp.ne.s32.totalorder %s90, %s93
      %p102 = scmp.eq.s32.totalorder %s17, 1
      %p103 = por %p101, %p102
      %p104 = scmp.ne.s32.totalorder %s93, %s94
      %p105 = scmp.eq.s32.totalorder %s17, 0
      %p106 = por %p104, %p105
      %p107 = scmp.ne.s32.totalorder %s93, %s94
      %p108 = scmp.eq.s32.totalorder %s18, 1
      %p109 = por %p107, %p108
      %p111 = scmp.ne.s32.totalorder %s94, %s110
      %p112 = scmp.eq.s32.totalorder %s18, 0
      %p113 = por %p111, %p112
      %p114 = scmp.le.s32.totalorder 1, %s12
      %p115 = scmp.lt.s32.totalorder %s12, 3
      %p116 = pnand %p114, %p115
      %p117 = pneg %p116
      // Predicated region
      $region9: #{tpu_custom_call.1} parent=5 // pred_check
        _
      $region10: #{tpu_custom_call.1} parent=5 // pred_check_branch
        %119 = sbr.rel (%p116) target = $region12
      $region11: #{tpu_custom_call.1} parent=5 // pred_region
        %s120 = ssub.s32 %s12, 1
        // Predicated region
        $region13: #{tpu_custom_call.1} parent=11 // pred_check
          %p121 = pneg %p59
        $region14: #{tpu_custom_call.1} parent=11 // pred_check_branch
          %123 = sbr.rel (%p121) target = $region16
        $region15: #{tpu_custom_call.1} parent=11 // pred_region
          _
        $region16: #{tpu_custom_call.1} parent=11 // pred_fallthru
          _
        // Predicated region
        $region17: #{tpu_custom_call.1} parent=11 // pred_check
          %p124 = pneg %p80
        $region18: #{tpu_custom_call.1} parent=11 // pred_check_branch
          %126 = sbr.rel (%p124) target = $region20
        $region19: #{tpu_custom_call.1} parent=11 // pred_region
          _
        $region20: #{tpu_custom_call.1} parent=11 // pred_fallthru
          _
      $region12: #{tpu_custom_call.1} parent=5 // pred_fallthru
        _
      %p127 = scmp.lt.s32.totalorder %s12, 2
      // Predicated region
      $region21: #{tpu_custom_call.1} parent=5 // pred_check
        %p128 = pneg %p127
      $region22: #{tpu_custom_call.1} parent=5 // pred_check_branch
        %130 = sbr.rel (%p128) target = $region24
      $region23: #{tpu_custom_call.1} parent=5 // pred_region
        // Predicated region
        $region25: #{tpu_custom_call.1} parent=23 // pred_check
          %p131 = pneg %p32
        $region26: #{tpu_custom_call.1} parent=23 // pred_check_branch
          %133 = sbr.rel (%p131) target = $region28
        $region27: #{tpu_custom_call.1} parent=23 // pred_region
          %p134 = scmp.lt.s32.totalorder %s12, 1
          %s135 = scalar_select %p134, %s12, 1
          %s136 = smul.addr %s135, 8
          %s137 = scalar_lea.vmem %s0, %s136
        $region28: #{tpu_custom_call.1} parent=23 // pred_fallthru
          _
      $region24: #{tpu_custom_call.1} parent=5 // pred_fallthru
        _
      %p138 = scmp.le.s32.totalorder 1, %s12
      %p139 = scmp.lt.s32.totalorder %s12, 3
      %p140 = pnand %p138, %p139
      %p141 = pneg %p140
      // Predicated region
      $region29: #{tpu_custom_call.1} parent=5 // pred_check
        _
      $region30: #{tpu_custom_call.1} parent=5 // pred_check_branch
        %143 = sbr.rel (%p140) target = $region32
      $region31: #{tpu_custom_call.1} parent=5 // pred_region
        %s144 = ssub.s32 %s12, 1
        %p145 = scmp.lt.s32.totalorder %s17, 1
        %s146 = scalar_select %p145, %s17, 1
        %s147 = smul.addr %s146, 8
        %s148 = scalar_lea.vmem %s0, %s147
        %p149 = pneg %p38
        %p150 = pneg %p35
        %p151 = pneg %p59
        %p152 = pneg %p56
        %p153 = pneg %p80
        %p154 = pneg %p77
        %p155 = pneg %p106
        %p156 = pneg %p103
        %s157 = sand.u32 %s93, 1
        %s158 = scalar_lea.sflag [#allocation3], %s157
        %s159 = sand.u32 %s93, 1
        %s160 = smul.addr %s159, 32
        %s161 = scalar_lea.vmem [#allocation2], %s160
        %p162 = scmp.lt.s32.totalorder %s17, 1
        %s163 = scalar_select %p162, %s17, 1
        %s164 = smul.addr %s163, 8
        %s165 = scalar_lea.vmem %s0, %s164
        %v166 = vld [vmem:[%s165] sm:$0xff]
        %v167 = vld [vmem:[%s1] sm:$0xff]
        %v168 = vld [vmem:[%s1 + $0x8] sm:$0xff]
        %v169 = vld [vmem:[%s2] sm:$0xf]
        %v171 = vlaneseq
        %v172 = vshrl.u32 %v171, 7
        %v173 = vsub.s32 0, %v172
        %v174 = vrot.slane %v169, %v173
        %v175 = vlaneseq
        %v176 = vshrl.u32 %v175, 7
        %v177 = vsub.s32 1, %v176
        %v178 = vrot.slane %v169, %v177
        %v179 = vlaneseq
        %v180 = vshrl.u32 %v179, 7
        %v181 = vsub.s32 2, %v180
        %v182 = vrot.slane %v169, %v181
        %v183 = vlaneseq
        %v184 = vshrl.u32 %v183, 7
        %v185 = vsub.s32 3, %v184
        %v186 = vrot.slane %v169, %v185
        %192 = vset.pattern.permute.xlu0 0
        %193 = vperm.xlu0 %192, %v166
        %v194 = vpop.permute.xlu0 %193
        %v198 = vlaneseq
        %v199 = vshrl.u32 %v198, 7
        %v200 = vsub.s32 0, %v199
        %v201 = vrot.slane %v167, %v200
        %v202 = vlaneseq
        %v203 = vshrl.u32 %v202, 7
        %v204 = vsub.s32 4, %v203
        %v205 = vrot.slane %v167, %v204
        %v206 = vlaneseq
        %v207 = vshrl.u32 %v206, 7
        %v208 = vsub.s32 0, %v207
        %v209 = vrot.slane %v168, %v208
        %v210 = vlaneseq
        %v211 = vshrl.u32 %v210, 7
        %v212 = vsub.s32 4, %v211
        %v213 = vrot.slane %v168, %v212
        %v218 = vlaneseq
        %v219 = vshrl.u32 %v218, 7
        %v220 = vsub.s32 0, %v219
        %v221 = vrot.slane %v201, %v220
        %v222 = vlaneseq
        %v223 = vshrl.u32 %v222, 7
        %v224 = vsub.s32 0, %v223
        %v225 = vrot.slane %v205, %v224
        %v226 = vlaneseq
        %v227 = vshrl.u32 %v226, 7
        %v228 = vsub.s32 0, %v227
        %v229 = vrot.slane %v209, %v228
        %v230 = vlaneseq
        %v231 = vshrl.u32 %v230, 7
        %v232 = vsub.s32 0, %v231
        %v233 = vrot.slane %v213, %v232
        %v234 = vmul.f32 %v194, %v221
        %v235 = vmul.f32 %v194, %v225
        %v236 = vmul.f32 %v194, %v229
        %v237 = vmul.f32 %v194, %v233
        %v238 = vadd.f32 %v174, %v234
        %v239 = vadd.f32 %v178, %v235
        %v240 = vadd.f32 %v182, %v236
        %v241 = vadd.f32 %v186, %v237
        %242 = vset.pattern.permute.xlu0 1
        %243 = vperm.xlu0 %242, %v166
        %v244 = vpop.permute.xlu0 %243
        %v246 = vlaneseq
        %v247 = vshrl.u32 %v246, 7
        %v248 = vsub.s32 1, %v247
        %v249 = vrot.slane %v167, %v248
        %v250 = vlaneseq
        %v251 = vshrl.u32 %v250, 7
        %v252 = vsub.s32 5, %v251
        %v253 = vrot.slane %v167, %v252
        %v254 = vlaneseq
        %v255 = vshrl.u32 %v254, 7
        %v256 = vsub.s32 1, %v255
        %v257 = vrot.slane %v168, %v256
        %v258 = vlaneseq
        %v259 = vshrl.u32 %v258, 7
        %v260 = vsub.s32 5, %v259
        %v261 = vrot.slane %v168, %v260
        %v266 = vlaneseq
        %v267 = vshrl.u32 %v266, 7
        %v268 = vsub.s32 1, %v267
        %v269 = vrot.slane %v249, %v268
        %v270 = vlaneseq
        %v271 = vshrl.u32 %v270, 7
        %v272 = vsub.s32 1, %v271
        %v273 = vrot.slane %v253, %v272
        %v274 = vlaneseq
        %v275 = vshrl.u32 %v274, 7
        %v276 = vsub.s32 1, %v275
        %v277 = vrot.slane %v257, %v276
        %v278 = vlaneseq
        %v279 = vshrl.u32 %v278, 7
        %v280 = vsub.s32 1, %v279
        %v281 = vrot.slane %v261, %v280
        %v282 = vmul.f32 %v244, %v269
        %v283 = vmul.f32 %v244, %v273
        %v284 = vmul.f32 %v244, %v277
        %v285 = vmul.f32 %v244, %v281
        %v286 = vadd.f32 %v238, %v282
        %v287 = vadd.f32 %v239, %v283
        %v288 = vadd.f32 %v240, %v284
        %v289 = vadd.f32 %v241, %v285
        %290 = vset.pattern.permute.xlu0 2
        %291 = vperm.xlu0 %290, %v166
        %v292 = vpop.permute.xlu0 %291
        %v294 = vlaneseq
        %v295 = vshrl.u32 %v294, 7
        %v296 = vsub.s32 2, %v295
        %v297 = vrot.slane %v167, %v296
        %v298 = vlaneseq
        %v299 = vshrl.u32 %v298, 7
        %v300 = vsub.s32 6, %v299
        %v301 = vrot.slane %v167, %v300
        %v302 = vlaneseq
        %v303 = vshrl.u32 %v302, 7
        %v304 = vsub.s32 2, %v303
        %v305 = vrot.slane %v168, %v304
        %v306 = vlaneseq
        %v307 = vshrl.u32 %v306, 7
        %v308 = vsub.s32 6, %v307
        %v309 = vrot.slane %v168, %v308
        %v314 = vlaneseq
        %v315 = vshrl.u32 %v314, 7
        %v316 = vsub.s32 2, %v315
        %v317 = vrot.slane %v297, %v316
        %v318 = vlaneseq
        %v319 = vshrl.u32 %v318, 7
        %v320 = vsub.s32 2, %v319
        %v321 = vrot.slane %v301, %v320
        %v322 = vlaneseq
        %v323 = vshrl.u32 %v322, 7
        %v324 = vsub.s32 2, %v323
        %v325 = vrot.slane %v305, %v324
        %v326 = vlaneseq
        %v327 = vshrl.u32 %v326, 7
        %v328 = vsub.s32 2, %v327
        %v329 = vrot.slane %v309, %v328
        %v330 = vmul.f32 %v292, %v317
        %v331 = vmul.f32 %v292, %v321
        %v332 = vmul.f32 %v292, %v325
        %v333 = vmul.f32 %v292, %v329
        %v334 = vadd.f32 %v286, %v330
        %v335 = vadd.f32 %v287, %v331
        %v336 = vadd.f32 %v288, %v332
        %v337 = vadd.f32 %v289, %v333
        %338 = vset.pattern.permute.xlu0 3
        %339 = vperm.xlu0 %338, %v166
        %v340 = vpop.permute.xlu0 %339
        %v342 = vlaneseq
        %v343 = vshrl.u32 %v342, 7
        %v344 = vsub.s32 3, %v343
        %v345 = vrot.slane %v167, %v344
        %v346 = vlaneseq
        %v347 = vshrl.u32 %v346, 7
        %v348 = vsub.s32 7, %v347
        %v349 = vrot.slane %v167, %v348
        %v350 = vlaneseq
        %v351 = vshrl.u32 %v350, 7
        %v352 = vsub.s32 3, %v351
        %v353 = vrot.slane %v168, %v352
        %v354 = vlaneseq
        %v355 = vshrl.u32 %v354, 7
        %v356 = vsub.s32 7, %v355
        %v357 = vrot.slane %v168, %v356
        %v362 = vlaneseq
        %v363 = vshrl.u32 %v362, 7
        %v364 = vsub.s32 3, %v363
        %v365 = vrot.slane %v345, %v364
        %v366 = vlaneseq
        %v367 = vshrl.u32 %v366, 7
        %v368 = vsub.s32 3, %v367
        %v369 = vrot.slane %v349, %v368
        %v370 = vlaneseq
        %v371 = vshrl.u32 %v370, 7
        %v372 = vsub.s32 3, %v371
        %v373 = vrot.slane %v353, %v372
        %v374 = vlaneseq
        %v375 = vshrl.u32 %v374, 7
        %v376 = vsub.s32 3, %v375
        %v377 = vrot.slane %v357, %v376
        %v378 = vmul.f32 %v340, %v365
        %v379 = vmul.f32 %v340, %v369
        %v380 = vmul.f32 %v340, %v373
        %v381 = vmul.f32 %v340, %v377
        %v382 = vadd.f32 %v334, %v378
        %v383 = vadd.f32 %v335, %v379
        %v384 = vadd.f32 %v336, %v380
        %v385 = vadd.f32 %v337, %v381
        %386 = vst [vmem:[%s161] sm:$0xff] %v382
        %387 = vst [vmem:[%s161 + $0x8] sm:$0xff] %v383
        %388 = vst [vmem:[%s161 + $0x10] sm:$0xff] %v384
        %389 = vst [vmem:[%s161 + $0x18] sm:$0xff] %v385
        %s390 = sand.u32 %s93, 1
        %s391 = scalar_lea.sflag [#allocation3], %s390
        %s392 = sand.u32 %s93, 1
        %s393 = smul.addr %s392, 32
        %s394 = scalar_lea.vmem [#allocation2], %s393
        // Predicated region
        $region33: #{tpu_custom_call.1} parent=31 // pred_check
          %p395 = pneg %p103
        $region34: #{tpu_custom_call.1} parent=31 // pred_check_branch
          %397 = sbr.rel (%p395) target = $region36
        $region35: #{tpu_custom_call.1} parent=31 // pred_region
          %s399 = ssub.s32 512, 512
          %400 = vsyncadd %s391, %s399
          %s401 = smul.addr %s17, 4
          %s402 = smul.addr %s401, 128
          %s403 = scalar_lea.hbm %s3, %s402
          %s405 = sshll.u32 %s394, 4
          %s406 = int_to_ptr.vmem [resolvable:$true] %s405
          %408 = dma.vmem_to_hbm [thread:$0]  %s406, 512, %s403, %s391
        $region36: #{tpu_custom_call.1} parent=31 // pred_fallthru
          _
      $region32: #{tpu_custom_call.1} parent=5 // pred_fallthru
        _
      %p409 = scmp.le.s32.totalorder 2, %s12
      // Predicated region
      $region37: #{tpu_custom_call.1} parent=5 // pred_check
        %p410 = pneg %p409
      $region38: #{tpu_custom_call.1} parent=5 // pred_check_branch
        %412 = sbr.rel (%p410) target = $region40
      $region39: #{tpu_custom_call.1} parent=5 // pred_region
        %s413 = ssub.s32 %s12, 2
        // Predicated region
        $region41: #{tpu_custom_call.1} parent=39 // pred_check
          %p414 = pneg %p109
        $region42: #{tpu_custom_call.1} parent=39 // pred_check_branch
          %416 = sbr.rel (%p414) target = $region44
        $region43: #{tpu_custom_call.1} parent=39 // pred_region
          %s417 = sand.u32 %s94, 1
          %s418 = scalar_lea.sflag [#allocation3], %s417
          %s419 = sand.u32 %s94, 1
          %s420 = smul.addr %s419, 32
          %s421 = scalar_lea.vmem [#allocation2], %s420
          %422 = dma.done %s418, 512
        $region44: #{tpu_custom_call.1} parent=39 // pred_fallthru
          _
      $region40: #{tpu_custom_call.1} parent=5 // pred_fallthru
        _
    $region6: #{tpu_custom_call.1} parent=1 // loop_footer
      %s16 = sadd.s32 1, %s12
    $region7: #{tpu_custom_call.1} parent=1 // loop_footer_branch
      %11 = sbr.rel target = $region3
    $region8: #{tpu_custom_call.1} parent=1 // loop_exit
      _
    %423 = vsyncpa [#allocation3], 1
    %s424 = scalar_lea.sflag [#allocation3], 1
    %425 = vsyncpa %s424, 1

</llo_original>
